<compile_context>
chip_gen: v7x
topology: tpu7x:2x2x1
jax: 0.10.0
libtpu: 0.0.40
codegen_flags: <defaults>
</compile_context>

<pallas_src>
import functools

import jax
import jax.numpy as jnp
from jax.experimental import pallas as pl
from jax.experimental.pallas import tpu as pltpu


def _l2norm_kernel(x_ref, w_ref, o_ref, *, eps):
    # x_ref: (1, C, T) block (channels on sublanes, pixels on lanes)
    # w_ref: (1, C, 1) full weight column (constant block across the grid)
    x = x_ref[0].astype(jnp.float32)                  # (C, T)
    w = w_ref[0].astype(jnp.float32)                  # (C, 1)
    sq_sum = jnp.sum(x * x, axis=0, keepdims=True)    # (1, T) sublane reduce
    norm = jnp.sqrt(sq_sum) + eps                     # eps placement matches reference
    inv = pl.reciprocal(norm, approx=False)           # exact: keep 1e-5 tolerance
    o_ref[0] = (x * inv * w).astype(o_ref.dtype)      # lane-dense store


def _choose_tile_hw(hw, c, itemsize, *, n=1,
                    target_bytes=2 * 1024 * 1024,
                    max_block_bytes=4 * 1024 * 1024,
                    min_grid_steps=4):
    """Lane-axis tile T for the (1, C, T) block.

    Padding-aware: choose the number of lane tiles k first (from a ~2 MiB byte
    target in the *input* dtype), then T = round_up(cdiv(hw, k), 128) so the
    boundary tile wastes as little work as possible.  The block is capped by
    bytes rather than a lane count, and we keep at least `min_grid_steps`
    total grid steps (n * k) so the pipeline has depth and v7x's two
    TensorCores both get work.
    """
    if hw <= 128:
        return hw                                     # single full-extent block
    row_bytes = itemsize * max(c, 1)
    target_elems = max(128, target_bytes // row_bytes)
    k = max(1, -(-hw // target_elems))                # lane tiles at byte target
    if n * k < min_grid_steps:                        # keep pipeline / megacore fed
        k_needed = -(-min_grid_steps // max(n, 1))
        k = min(-(-hw // 128), max(k, k_needed))
    tile = -(-hw // k)
    tile = ((tile + 127) // 128) * 128                # lane multiple -> unmasked stores
    max_tile = max(128, (max_block_bytes // row_bytes) // 128 * 128)
    tile = min(tile, max_tile)
    if tile >= hw:                                    # full extent is always legal
        return hw
    return tile


def l2norm(x, weight, *, eps=1e-10, tile_hw=None):
    """x: (N, C, H, W) float array. weight: (C,). Returns same shape/dtype as x."""
    n, c, h, w = x.shape
    hw = h * w

    # Free reshapes only (no HBM round-trips, no transposes).
    x3d = x.reshape(n, c, hw)
    w3d = weight.reshape(1, c, 1)

    if tile_hw is None:
        tile_hw = _choose_tile_hw(hw, c, jnp.dtype(x.dtype).itemsize, n=n)
    else:
        tile_hw = min(tile_hw, hw)
        if tile_hw != hw and tile_hw % 128:
            tile_hw = ((tile_hw + 127) // 128) * 128  # keep the (8,128) rule

    grid = (n, pl.cdiv(hw, tile_hw))

    out3d = pl.pallas_call(
        functools.partial(_l2norm_kernel, eps=eps),
        out_shape=jax.ShapeDtypeStruct((n, c, hw), x.dtype),
        grid_spec=pltpu.PrefetchScalarGridSpec(
            num_scalar_prefetch=0,
            grid=grid,
            in_specs=[
                pl.BlockSpec((1, c, tile_hw), lambda b, t: (b, 0, t)),
                # Constant block index -> DMA'd once and kept resident.
                # (pl.Buffered(1) would shave its second VMEM buffer, but the
                #  default double-buffer costs < ~256 KiB even at C=512.)
                pl.BlockSpec((1, c, 1), lambda b, t: (0, 0, 0)),
            ],
            out_specs=pl.BlockSpec((1, c, tile_hw), lambda b, t: (b, 0, t)),
        ),
        compiler_params=pltpu.CompilerParams(
            dimension_semantics=("parallel", "parallel"),
            vmem_limit_bytes=32 * 1024 * 1024,   # safe on v7x (64 MiB VMEM)
        ),
    )(x3d, w3d)

    return out3d.reshape(n, c, h, w)


def l2norm_reference(x, weight, eps=1e-10):
    x_f = x.astype(jnp.float32)
    norm = jnp.sqrt(jnp.sum(x_f * x_f, axis=1, keepdims=True)) + eps
    out = weight[None, :, None, None].astype(jnp.float32) * x_f / norm
    return out.astype(x.dtype)


if __name__ == "__main__":
    key = jax.random.PRNGKey(0)
    kx, kw, kx2, kx3 = jax.random.split(key, 4)

    N, C, H, W = 2, 4, 16, 16
    scale = 20.0
    eps = 1e-10

    x = jax.random.normal(kx, (N, C, H, W), dtype=jnp.float32)
    # mmdet initializes the weight to `scale`; add a small per-channel
    # perturbation so the broadcast is actually exercised.
    weight = scale + 0.1 * jax.random.normal(kw, (C,), dtype=jnp.float32)

    out = jax.block_until_ready(l2norm(x, weight, eps=eps))
    ref = l2norm_reference(x, weight, eps=eps)
    assert out.shape == x.shape and out.dtype == x.dtype
    assert jnp.allclose(out, ref, atol=1e-5, rtol=1e-5), "mismatch vs reference"

    # Non-divisible H*W exercises the boundary-block path (no wrapper pad/slice).
    x2 = jax.random.normal(kx2, (2, 4, 15, 20), dtype=jnp.float32)  # hw = 300
    out2 = jax.block_until_ready(l2norm(x2, weight, eps=eps, tile_hw=128))
    ref2 = l2norm_reference(x2, weight, eps=eps)
    assert jnp.allclose(out2, ref2, atol=1e-5, rtol=1e-5), "mismatch (boundary path)"

    # bf16 input exercises the dtype-aware tiling and the in-kernel f32 cast.
    C3 = 8
    x3 = jax.random.normal(kx3, (2, C3, 16, 16), dtype=jnp.bfloat16)
    w3 = scale + 0.1 * jax.random.normal(kw, (C3,), dtype=jnp.float32)
    out3 = jax.block_until_ready(l2norm(x3, w3, eps=eps))
    ref3 = l2norm_reference(x3, w3, eps=eps)
    assert out3.dtype == jnp.bfloat16
    assert jnp.allclose(out3.astype(jnp.float32), ref3.astype(jnp.float32),
                        atol=2e-1, rtol=2e-2), "mismatch (bf16 path)"

    print("KERNEL_OK")
</pallas_src>

<mosaic_0001>
module attributes {stable_mosaic.version = 11 : i64} {
  func.func @_l2norm_kernel(%arg0: i32, %arg1: i32, %arg2: memref<1x4x128xf32, #tpu.memory_space<vmem>>, %arg3: memref<1x4x1xf32, #tpu.memory_space<vmem>>, %arg4: memref<1x4x128xf32, #tpu.memory_space<vmem>>) attributes {dimension_semantics = [#tpu.dimension_semantics<parallel>, #tpu.dimension_semantics<parallel>], iteration_bounds = array<i64: 2, 2>, scalar_prefetch = 0 : i64, scratch_operands = 0 : i64, tpu.core_type = #tpu.core_type<tc>, window_params = [{transform_indices = @transform_0, window_bounds = array<i64: 1, 4, 128>}, {pipeline_mode = #tpu.pipeline_mode<synchronous>, transform_indices = @transform_1, window_bounds = array<i64: 1, 4, 1>}, {transform_indices = @transform_2, window_bounds = array<i64: 1, 4, 128>}]} {
    %c0 = arith.constant 0 : index
    %c0_0 = arith.constant 0 : index
    %c0_1 = arith.constant 0 : index
    %0 = vector.load %arg2[%c0, %c0_0, %c0_1] : memref<1x4x128xf32, #tpu.memory_space<vmem>>, vector<1x4x128xf32>
    %1 = vector.shape_cast %0 : vector<1x4x128xf32> to vector<4x128xf32>
    %c0_2 = arith.constant 0 : index
    %c0_3 = arith.constant 0 : index
    %c0_4 = arith.constant 0 : index
    %2 = vector.load %arg3[%c0_2, %c0_3, %c0_4] : memref<1x4x1xf32, #tpu.memory_space<vmem>>, vector<1x4x1xf32>
    %3 = vector.shape_cast %2 : vector<1x4x1xf32> to vector<4x1xf32>
    %4 = arith.mulf %1, %1 : vector<4x128xf32>
    %cst = arith.constant dense<0.000000e+00> : vector<128xf32>
    %5 = vector.multi_reduction <add>, %4, %cst [0] : vector<4x128xf32> to vector<128xf32>
    %6 = vector.shape_cast %5 : vector<128xf32> to vector<1x128xf32>
    %7 = math.sqrt %6 : vector<1x128xf32>
    %cst_5 = arith.constant 1.000000e-10 : f32
    %8 = vector.broadcast %cst_5 : f32 to vector<1x128xf32>
    %9 = arith.addf %7, %8 : vector<1x128xf32>
    %10 = tpu.reciprocal %9 : vector<1x128xf32> -> vector<1x128xf32>
    %11 = vector.broadcast %10 : vector<1x128xf32> to vector<4x128xf32>
    %12 = arith.mulf %1, %11 : vector<4x128xf32>
    %13 = vector.broadcast %3 : vector<4x1xf32> to vector<4x128xf32>
    %14 = arith.mulf %12, %13 : vector<4x128xf32>
    %c0_6 = arith.constant 0 : index
    %c0_7 = arith.constant 0 : index
    %c0_8 = arith.constant 0 : index
    %15 = vector.load %arg4[%c0_6, %c0_7, %c0_8] : memref<1x4x128xf32, #tpu.memory_space<vmem>>, vector<1x4x128xf32>
    %16 = vector.shape_cast %15 : vector<1x4x128xf32> to vector<4x128xf32>
    %17 = vector.shape_cast %14 : vector<4x128xf32> to vector<1x4x128xf32>
    tpu.vector_store %arg4[%c0_6, %c0_7, %c0_8], %17 {strides = array<i32>} : memref<1x4x128xf32, #tpu.memory_space<vmem>>, vector<1x4x128xf32>,
    return
  }
  func.func @transform_0(%arg0: i32, %arg1: i32) -> (i32, i32, i32) {
    %c0_i32 = arith.constant 0 : i32
    %c0_i32_0 = arith.constant 0 : i32
    return %arg0, %c0_i32, %arg1 : i32, i32, i32
  }
  func.func @transform_1(%arg0: i32, %arg1: i32) -> (i32, i32, i32) {
    %c0_i32 = arith.constant 0 : i32
    %c0_i32_0 = arith.constant 0 : i32
    %c0_i32_1 = arith.constant 0 : i32
    %c0_i32_2 = arith.constant 0 : i32
    return %c0_i32, %c0_i32_0, %c0_i32_1 : i32, i32, i32
  }
  func.func @transform_2(%arg0: i32, %arg1: i32) -> (i32, i32, i32) {
    %c0_i32 = arith.constant 0 : i32
    %c0_i32_0 = arith.constant 0 : i32
    return %arg0, %c0_i32, %arg1 : i32, i32, i32
  }
}

</mosaic_0001>

<llo_original>
// kernel: tpu_custom_call.1
$region0: #{tpu_custom_call.1}
  #allocation0 [shape = 'u32[]', space=smem, size = 0x4, offset = 0x4, fixed_abs, tag = 'smem constant byte address 0x4 - core index']
  #allocation1 [shape = 'u32[144,128]{1,0:T(1,128)}', space=vmem, size = 0x12000, scoped, tag = 'internal scratch']
  %s0 = inlined_call_operand.hbm [shape: f32[2,4,256], index: 0, kind: input, shape index: {}]
  %s1 = inlined_call_operand.vmem [shape: f32[1,4,1], index: 1, kind: input, shape index: {}]
  %s2 = inlined_call_operand.hbm [shape: f32[2,4,256], index: 2, kind: output, shape index: {}]
  %s3 = sld [smem:[#allocation0]]
  $region45: #{tpu_custom_call.1} parent=0
    _
  %s5 = ssub.s32 1, %s3
  %s6 = scalar_select 0, %s5, %s3
  $region1: #{tpu_custom_call.1} parent=0
    #allocation2 [shape = 'u8[4096]{0}', space=vmem, size = 0x1000, scoped, tag = 'input window, operand 0']
    #allocation3 [shape = 's32[2]{0}', space=sflag, size = 0x8, scoped, tag = 'scoped memory for tpu_custom_call.1']
    #allocation4 [shape = 's32[2]{0}', space=sflag, size = 0x8, scoped, tag = 'scoped memory for tpu_custom_call.1']
    #allocation5 [shape = 'u8[4096]{0}', space=vmem, size = 0x1000, scoped, tag = 'output window, operand 0']
    %7 = vsyncpa [#allocation3], 0
    %s8 = scalar_lea.sflag [#allocation3], 1
    %9 = vsyncpa %s8, 0
    %10 = vsyncpa [#allocation4], 0
    %s11 = scalar_lea.sflag [#allocation4], 1
    %12 = vsyncpa %s11, 0
    loop: start=0, step=1, limit=6
    $region2: #{tpu_custom_call.1} parent=1 // loop_pre_header
      _
    $region3: #{tpu_custom_call.1} parent=1 // loop_header
      %s14 = sphi 0, %s18
      %p15 = scmp.ge.s32.totalorder %s14, 6
      %s21 = sphi 0, %s33
      %s22 = sphi 0, %s29
      %s23 = sphi 0, %s21
      %s24 = sphi 0, %s22
      %s25 = sphi 0, %s23
      %s26 = sphi 0, %s24
      %s38 = sphi 0, %s40
      %s41 = sphi 0, %s38
      %s42 = sphi 0, %s41
      %s58 = sphi 0, %s42
      %s62 = sphi 0, %s62
      %s64 = sphi 0, %s62
      %s65 = sphi 0, %s64
      %s79 = sphi 0, %s65
      %s87 = sphi 0, %s89
      %s90 = sphi 0, %s87
      %s91 = sphi 0, %s90
      %s107 = sphi 0, %s91
    $region4: #{tpu_custom_call.1} parent=1 // loop_header_branch
      %17 = sbr.rel (%p15) target = $region8
    $region5: #{tpu_custom_call.1} parent=1 // loop_body
      %s19 = ssub.s32 %s14, 1
      %s20 = ssub.s32 %s14, 2
      %s27 = sadd.s32 1, %s22
      %p28 = scmp.ge.s32.totalorder %s27, 2
      %s29 = scalar_select %p28, 0, %s27
      %s30 = sadd.s32 1, %s21
      %s31 = scalar_select %p28, %s30, %s21
      %p32 = scmp.ge.s32.totalorder %s31, 2
      %s33 = scalar_select %p32, 0, %s31
      %s34 = ssub.s32 %s21, %s33
      %s35 = ssub.s32 %s22, %s29
      %s36 = sor.u32 %s34, %s35
      %p37 = scmp.eq.s32.totalorder %s36, 0
      %s39 = sadd.s32 %s38, 1
      %s40 = scalar_select %p37, %s38, %s39
      %p43 = pneg %p37
      %p44 = scmp.eq.s32.totalorder %s14, 3
      %p45 = por %p43, %p44
      %p46 = scmp.ne.s32.totalorder %s38, %s41
      %p47 = scmp.eq.s32.totalorder %s14, 0
      %p48 = por %p46, %p47
      %p49 = scmp.ne.s32.totalorder %s38, %s41
      %p50 = scmp.eq.s32.totalorder %s19, 3
      %p51 = por %p49, %p50
      %p52 = scmp.ne.s32.totalorder %s41, %s42
      %p53 = scmp.eq.s32.totalorder %s19, 0
      %p54 = por %p52, %p53
      %p55 = scmp.ne.s32.totalorder %s41, %s42
      %p56 = scmp.eq.s32.totalorder %s20, 3
      %p57 = por %p55, %p56
      %p59 = scmp.ne.s32.totalorder %s42, %s58
      %p60 = scmp.eq.s32.totalorder %s20, 0
      %p61 = por %p59, %p60
      %s63 = sadd.s32 %s62, 1
      %p66 = scmp.eq.s32.totalorder %s14, 3
      %p67 = scmp.ne.s32.totalorder %s62, %s64
      %p68 = scmp.eq.s32.totalorder %s14, 0
      %p69 = por %p67, %p68
      %p70 = scmp.ne.s32.totalorder %s62, %s64
      %p71 = scmp.eq.s32.totalorder %s19, 3
      %p72 = por %p70, %p71
      %p73 = scmp.ne.s32.totalorder %s64, %s65
      %p74 = scmp.eq.s32.totalorder %s19, 0
      %p75 = por %p73, %p74
      %p76 = scmp.ne.s32.totalorder %s64, %s65
      %p77 = scmp.eq.s32.totalorder %s20, 3
      %p78 = por %p76, %p77
      %p80 = scmp.ne.s32.totalorder %s65, %s79
      %p81 = scmp.eq.s32.totalorder %s20, 0
      %p82 = por %p80, %p81
      %s83 = ssub.s32 %s21, %s33
      %s84 = ssub.s32 %s22, %s29
      %s85 = sor.u32 %s83, %s84
      %p86 = scmp.eq.s32.totalorder %s85, 0
      %s88 = sadd.s32 %s87, 1
      %s89 = scalar_select %p86, %s87, %s88
      %p92 = pneg %p86
      %p93 = scmp.eq.s32.totalorder %s14, 3
      %p94 = por %p92, %p93
      %p95 = scmp.ne.s32.totalorder %s87, %s90
      %p96 = scmp.eq.s32.totalorder %s14, 0
      %p97 = por %p95, %p96
      %p98 = scmp.ne.s32.totalorder %s87, %s90
      %p99 = scmp.eq.s32.totalorder %s19, 3
      %p100 = por %p98, %p99
      %p101 = scmp.ne.s32.totalorder %s90, %s91
      %p102 = scmp.eq.s32.totalorder %s19, 0
      %p103 = por %p101, %p102
      %p104 = scmp.ne.s32.totalorder %s90, %s91
      %p105 = scmp.eq.s32.totalorder %s20, 3
      %p106 = por %p104, %p105
      %p108 = scmp.ne.s32.totalorder %s91, %s107
      %p109 = scmp.eq.s32.totalorder %s20, 0
      %p110 = por %p108, %p109
      %p111 = scmp.le.s32.totalorder 1, %s14
      %p112 = scmp.lt.s32.totalorder %s14, 5
      %p113 = pnand %p111, %p112
      %p114 = pneg %p113
      // Predicated region
      $region9: #{tpu_custom_call.1} parent=5 // pred_check
        _
      $region10: #{tpu_custom_call.1} parent=5 // pred_check_branch
        %116 = sbr.rel (%p113) target = $region12
      $region11: #{tpu_custom_call.1} parent=5 // pred_region
        %s117 = ssub.s32 %s14, 1
        // Predicated region
        $region13: #{tpu_custom_call.1} parent=11 // pred_check
          %p118 = pneg %p75
        $region14: #{tpu_custom_call.1} parent=11 // pred_check_branch
          %120 = sbr.rel (%p118) target = $region16
        $region15: #{tpu_custom_call.1} parent=11 // pred_region
          _
        $region16: #{tpu_custom_call.1} parent=11 // pred_fallthru
          _
      $region12: #{tpu_custom_call.1} parent=5 // pred_fallthru
        _
      %p121 = scmp.lt.s32.totalorder %s14, 4
      // Predicated region
      $region17: #{tpu_custom_call.1} parent=5 // pred_check
        %p122 = pneg %p121
      $region18: #{tpu_custom_call.1} parent=5 // pred_check_branch
        %124 = sbr.rel (%p122) target = $region20
      $region19: #{tpu_custom_call.1} parent=5 // pred_region
        // Predicated region
        $region21: #{tpu_custom_call.1} parent=19 // pred_check
          %p125 = pneg %p48
        $region22: #{tpu_custom_call.1} parent=19 // pred_check_branch
          %127 = sbr.rel (%p125) target = $region24
        $region23: #{tpu_custom_call.1} parent=19 // pred_region
          %s128 = sand.u32 %s38, 1
          %s129 = scalar_lea.sflag [#allocation3], %s128
          %s130 = sand.u32 %s38, 1
          %s131 = smul.addr %s130, 4
          %s132 = scalar_lea.vmem [#allocation2], %s131
          %s134 = ssub.s32 64, 64
          %135 = vsyncadd %s129, %s134
          %s136 = smul.addr %s21, 2
          %s137 = sadd.s32 %s22, %s136
          %s138 = smul.addr %s137, 64
          %s139 = scalar_lea.hbm %s0, %s138
          %s141 = sshll.u32 %s132, 4
          %s142 = int_to_ptr.vmem [resolvable:$true] %s141
          %144 = dma.hbm_to_vmem [thread:$0]  %s139, 64, %s142, %s129
        $region24: #{tpu_custom_call.1} parent=19 // pred_fallthru
          _
      $region20: #{tpu_custom_call.1} parent=5 // pred_fallthru
        _
      %p145 = scmp.le.s32.totalorder 1, %s14
      %p146 = scmp.lt.s32.totalorder %s14, 5
      %p147 = pnand %p145, %p146
      %p148 = pneg %p147
      // Predicated region
      $region25: #{tpu_custom_call.1} parent=5 // pred_check
        _
      $region26: #{tpu_custom_call.1} parent=5 // pred_check_branch
        %150 = sbr.rel (%p147) target = $region28
      $region27: #{tpu_custom_call.1} parent=5 // pred_region
        %s151 = ssub.s32 %s14, 1
        %s152 = sand.u32 %s41, 1
        %s153 = scalar_lea.sflag [#allocation3], %s152
        %s154 = sand.u32 %s41, 1
        %s155 = smul.addr %s154, 4
        %s156 = scalar_lea.vmem [#allocation2], %s155
        // Predicated region
        $region29: #{tpu_custom_call.1} parent=27 // pred_check
          %p157 = pneg %p54
        $region30: #{tpu_custom_call.1} parent=27 // pred_check_branch
          %159 = sbr.rel (%p157) target = $region32
        $region31: #{tpu_custom_call.1} parent=27 // pred_region
          %160 = dma.done %s153, 64
        $region32: #{tpu_custom_call.1} parent=27 // pred_fallthru
          _
        %s161 = sand.u32 %s41, 1
        %s162 = scalar_lea.sflag [#allocation3], %s161
        %s163 = sand.u32 %s41, 1
        %s164 = smul.addr %s163, 4
        %s165 = scalar_lea.vmem [#allocation2], %s164
        %p166 = pneg %p54
        %p167 = pneg %p51
        %p168 = pneg %p75
        %p169 = pneg %p72
        %p170 = pneg %p103
        %p171 = pneg %p100
        %s172 = sand.u32 %s90, 1
        %s173 = scalar_lea.sflag [#allocation4], %s172
        %s174 = sand.u32 %s90, 1
        %s175 = smul.addr %s174, 4
        %s176 = scalar_lea.vmem [#allocation5], %s175
        %v177 = vld [vmem:[%s156] sm:$0xf]
        %v178 = vld [vmem:[%s1] sm:$0xf]
        %v179 = vmul.f32 %v177, %v177
        %vm180 = vcmask 1043456
        %v181 = vsel %vm180, %v179, 0.0
        %v182 = vrot.slane %v181, 4
        %v183 = vadd.f32 %v181, %v182
        %v184 = vrot.slane %v183, 2
        %v185 = vadd.f32 %v183, %v184
        %v186 = vrot.slane %v185, 1
        %v187 = vadd.f32 %v185, %v186
        %v188 = vrsqrt.pop %v187
        %v189 = vmul.f32 %v187, %v188
        %vm190 = vcmp.eq.f32.partialorder %v187, inf
        %v191 = vsel %vm190, %v187, %v189
        %vm192 = vcmp.eq.f32.partialorder %v187, 0.0
        %v193 = vand.u32 %v187, 2147483648
        %v194 = vsel %vm192, %v193, %v191
        %v195 = vadd.f32 %v194, 1e-10
        %v196 = vrcp.pop %v195
        %v197 = vmul.f32 %v177, %v196
        %199 = vset.pattern.permute.xlu0 0
        %200 = vperm.xlu0 %199, %v178
        %v201 = vpop.permute.xlu0 %200
        %v203 = vmul.f32 %v197, %v201
        %204 = vst [vmem:[%s176] sm:$0xf] %v203
        %s205 = sand.u32 %s90, 1
        %s206 = scalar_lea.sflag [#allocation4], %s205
        %s207 = sand.u32 %s90, 1
        %s208 = smul.addr %s207, 4
        %s209 = scalar_lea.vmem [#allocation5], %s208
        // Predicated region
        $region33: #{tpu_custom_call.1} parent=27 // pred_check
          %p210 = pneg %p100
        $region34: #{tpu_custom_call.1} parent=27 // pred_check_branch
          %212 = sbr.rel (%p210) target = $region36
        $region35: #{tpu_custom_call.1} parent=27 // pred_region
          %s214 = ssub.s32 64, 64
          %215 = vsyncadd %s206, %s214
          %s216 = smul.addr %s23, 2
          %s217 = sadd.s32 %s24, %s216
          %s218 = smul.addr %s217, 64
          %s219 = scalar_lea.hbm %s2, %s218
          %s221 = sshll.u32 %s209, 4
          %s222 = int_to_ptr.vmem [resolvable:$true] %s221
          %224 = dma.vmem_to_hbm [thread:$0]  %s222, 64, %s219, %s206
        $region36: #{tpu_custom_call.1} parent=27 // pred_fallthru
          _
      $region28: #{tpu_custom_call.1} parent=5 // pred_fallthru
        _
      %p225 = scmp.le.s32.totalorder 2, %s14
      // Predicated region
      $region37: #{tpu_custom_call.1} parent=5 // pred_check
        %p226 = pneg %p225
      $region38: #{tpu_custom_call.1} parent=5 // pred_check_branch
        %228 = sbr.rel (%p226) target = $region40
      $region39: #{tpu_custom_call.1} parent=5 // pred_region
        %s229 = ssub.s32 %s14, 2
        // Predicated region
        $region41: #{tpu_custom_call.1} parent=39 // pred_check
          %p230 = pneg %p106
        $region42: #{tpu_custom_call.1} parent=39 // pred_check_branch
          %232 = sbr.rel (%p230) target = $region44
        $region43: #{tpu_custom_call.1} parent=39 // pred_region
          %s233 = sand.u32 %s91, 1
          %s234 = scalar_lea.sflag [#allocation4], %s233
          %s235 = sand.u32 %s91, 1
          %s236 = smul.addr %s235, 4
          %s237 = scalar_lea.vmem [#allocation5], %s236
          %238 = dma.done %s234, 64
        $region44: #{tpu_custom_call.1} parent=39 // pred_fallthru
          _
      $region40: #{tpu_custom_call.1} parent=5 // pred_fallthru
        _
    $region6: #{tpu_custom_call.1} parent=1 // loop_footer
      %s18 = sadd.s32 1, %s14
    $region7: #{tpu_custom_call.1} parent=1 // loop_footer_branch
      %13 = sbr.rel target = $region3
    $region8: #{tpu_custom_call.1} parent=1 // loop_exit
      _
    %239 = vsyncpa [#allocation3], 1
    %s240 = scalar_lea.sflag [#allocation3], 1
    %241 = vsyncpa %s240, 1
    %242 = vsyncpa [#allocation4], 1
    %s243 = scalar_lea.sflag [#allocation4], 1
    %244 = vsyncpa %s243, 1

</llo_original>
